<compile_context>
chip_gen: v7x
topology: tpu7x:2x2x1
jax: 0.10.0
libtpu: 0.0.40
codegen_flags: <defaults>
</compile_context>

<pallas_src>
import jax
import jax.numpy as jnp
from jax import lax
from jax.experimental import pallas as pl
from jax.experimental.pallas import tpu as pltpu


def _linear_kernel(x_ref, w_ref, b_ref, o_ref, acc_ref):
    """Computes one (TM, TN) output tile; K is reduced over the innermost grid axis."""
    k = pl.program_id(2)

    @pl.when(k == 0)
    def _init():
        acc_ref[...] = jnp.zeros_like(acc_ref)

    # x_ref: (TM, TK), w_ref: (TN, TK) -> contract the K (last) dims -> (TM, TN)
    acc_ref[...] += lax.dot_general(
        x_ref[...],
        w_ref[...],
        dimension_numbers=(((1,), (1,)), ((), ())),
        preferred_element_type=jnp.float32,
    )

    @pl.when(k == pl.num_programs(2) - 1)
    def _finalize():
        o_ref[...] = (acc_ref[...] + b_ref[...].astype(jnp.float32)).astype(o_ref.dtype)


def _default_tiles(batch, d_in, d_out):
    # Sublane dim: multiple of 8 or the full extent; lane dims: multiple of 128
    # (256-aligned on v6e/v7x when large) or the full extent.
    tm = batch if batch <= 256 else 256
    tn = d_out if d_out <= 1024 else 1024
    tk = d_in if d_in <= 1024 else 1024
    return tm, tn, tk


def linear_head(x, weight, bias, *, tm=None, tn=None, tk=None):
    """y = x @ weight.T + bias in float32 (LinearHead.forward semantics).

    x:      (B, d_in)       any float dtype (cast to f32, per the module)
    weight: (d_out, d_in)   PyTorch nn.Linear layout, used as-is (no transpose copy)
    bias:   (d_out,)
    returns (B, d_out) float32
    """
    x = x.astype(jnp.float32)  # module does x.to(torch.float32)
    batch, d_in = x.shape
    d_out, d_in_w = weight.shape
    assert d_in_w == d_in, "weight must be (d_out, d_in)"
    b2d = bias.reshape(1, d_out)

    dtm, dtn, dtk = _default_tiles(batch, d_in, d_out)
    tm = dtm if tm is None else tm
    tn = dtn if tn is None else tn
    tk = dtk if tk is None else tk

    # K is a reduction axis: out-of-bounds reads there would corrupt the
    # accumulator, so zero-pad K only when the tile does not divide d_in.
    pad_k = (-d_in) % tk
    if pad_k:
        x = jnp.pad(x, ((0, 0), (0, pad_k)))
        weight = jnp.pad(weight, ((0, 0), (0, pad_k)))
    d_in_p = d_in + pad_k

    grid = (pl.cdiv(batch, tm), pl.cdiv(d_out, tn), d_in_p // tk)

    # VMEM footprint: double-buffered inputs + double-buffered output + accumulator.
    in_itemsize = max(jnp.dtype(x.dtype).itemsize, jnp.dtype(weight.dtype).itemsize)
    vmem_est = 2 * (tm * tk + tn * tk + tn) * in_itemsize + 3 * tm * tn * 4
    vmem_limit = int(min(48 * 1024 * 1024, max(2 * vmem_est, 16 * 1024 * 1024)))

    cost = pl.CostEstimate(
        flops=2 * batch * d_in * d_out,
        transcendentals=0,
        bytes_accessed=(x.size * jnp.dtype(x.dtype).itemsize
                        + weight.size * jnp.dtype(weight.dtype).itemsize
                        + bias.size * jnp.dtype(bias.dtype).itemsize
                        + batch * d_out * 4),
    )

    return pl.pallas_call(
        _linear_kernel,
        out_shape=jax.ShapeDtypeStruct((batch, d_out), jnp.float32),
        grid_spec=pltpu.PrefetchScalarGridSpec(
            num_scalar_prefetch=0,
            grid=grid,
            in_specs=[
                pl.BlockSpec((tm, tk), lambda i, j, k: (i, k)),   # x tile
                pl.BlockSpec((tn, tk), lambda i, j, k: (j, k)),   # weight tile (PyTorch layout)
                pl.BlockSpec((1, tn), lambda i, j, k: (0, j)),    # bias tile
            ],
            out_specs=pl.BlockSpec((tm, tn), lambda i, j, k: (i, j)),
            scratch_shapes=[pltpu.VMEM((tm, tn), jnp.float32)],
        ),
        compiler_params=pltpu.CompilerParams(
            dimension_semantics=("parallel", "parallel", "arbitrary"),
            vmem_limit_bytes=vmem_limit,
        ),
        cost_estimate=cost,
    )(x, weight, b2d)


if __name__ == "__main__":
    key = jax.random.PRNGKey(0)
    k_x, k_w, k_b = jax.random.split(key, 3)

    batch, input_dim, output_dim = 16, 256, 128

    x = jax.random.normal(k_x, (batch, input_dim), dtype=jnp.float32)
    # Deterministic synthetic Linear params of the right shapes (PyTorch layout).
    weight = jax.random.normal(k_w, (output_dim, input_dim), dtype=jnp.float32) * 0.1
    bias = jax.random.normal(k_b, (output_dim,), dtype=jnp.float32) * 0.1

    y_ref = x @ weight.T + bias

    # Default tiling (single tile at these small shapes).
    y = jax.block_until_ready(linear_head(x, weight, bias))
    assert y.shape == (batch, output_dim)
    assert jnp.allclose(y, y_ref, atol=1e-4, rtol=1e-4)

    # Forced multi-step grid: exercises M-parallel tiling and the K-reduction
    # accumulator with pl.when init/finalize (same path used at real sizes).
    y2 = jax.block_until_ready(linear_head(x, weight, bias, tm=8, tn=128, tk=128))
    assert jnp.allclose(y2, y_ref, atol=1e-4, rtol=1e-4)

    print("KERNEL_OK")
</pallas_src>

<mosaic_0001>
module attributes {stable_mosaic.version = 11 : i64} {
  func.func @_linear_kernel(%arg0: i32, %arg1: i32, %arg2: i32, %arg3: memref<16x256xf32, #tpu.memory_space<vmem>>, %arg4: memref<128x256xf32, #tpu.memory_space<vmem>>, %arg5: memref<1x128xf32, #tpu.memory_space<vmem>>, %arg6: memref<16x128xf32, #tpu.memory_space<vmem>>, %arg7: memref<16x128xf32, #tpu.memory_space<vmem>>) attributes {dimension_semantics = [#tpu.dimension_semantics<parallel>, #tpu.dimension_semantics<parallel>, #tpu.dimension_semantics<arbitrary>], iteration_bounds = array<i64: 1, 1, 1>, scalar_prefetch = 0 : i64, scratch_operands = 1 : i64, tpu.core_type = #tpu.core_type<tc>, window_params = [{transform_indices = @transform_0, window_bounds = array<i64: 16, 256>}, {transform_indices = @transform_1, window_bounds = array<i64: 128, 256>}, {transform_indices = @transform_2, window_bounds = array<i64: 1, 128>}, {transform_indices = @transform_3, window_bounds = array<i64: 16, 128>}]} {
    %c0_i32 = arith.constant 0 : i32
    %0 = arith.cmpi eq, %arg2, %c0_i32 : i32
    %1 = arith.extui %0 : i1 to i32
    %c0_i32_0 = arith.constant 0 : i32
    %2 = arith.cmpi ne, %1, %c0_i32_0 : i32
    scf.if %2 {
      %cst_10 = arith.constant 0.000000e+00 : f32
      %12 = vector.broadcast %cst_10 : f32 to vector<16x128xf32>
      %c0_11 = arith.constant 0 : index
      %c0_12 = arith.constant 0 : index
      %13 = vector.load %arg7[%c0_11, %c0_12] : memref<16x128xf32, #tpu.memory_space<vmem>>, vector<16x128xf32>
      tpu.vector_store %arg7[%c0_11, %c0_12], %12 {strides = array<i32>} : memref<16x128xf32, #tpu.memory_space<vmem>>, vector<16x128xf32>,
    } else {
    }
    %c0 = arith.constant 0 : index
    %c0_1 = arith.constant 0 : index
    %3 = vector.load %arg7[%c0, %c0_1] : memref<16x128xf32, #tpu.memory_space<vmem>>, vector<16x128xf32>
    %c0_2 = arith.constant 0 : index
    %c0_3 = arith.constant 0 : index
    %4 = vector.load %arg3[%c0_2, %c0_3] : memref<16x256xf32, #tpu.memory_space<vmem>>, vector<16x256xf32>
    %c0_4 = arith.constant 0 : index
    %c0_5 = arith.constant 0 : index
    %5 = vector.load %arg4[%c0_4, %c0_5] : memref<128x256xf32, #tpu.memory_space<vmem>>, vector<128x256xf32>
    %cst = arith.constant dense<0.000000e+00> : vector<16x128xf32>
    %6 = tpu.matmul %4, %5, %cst {dimension_numbers = #tpu.dot_dimension_numbers<[1], [1], [0], [0], [0, 0, 1, 0], [], []>} : vector<16x256xf32>, vector<128x256xf32>, vector<16x128xf32> -> vector<16x128xf32>
    %7 = arith.addf %3, %6 : vector<16x128xf32>
    %c0_6 = arith.constant 0 : index
    %c0_7 = arith.constant 0 : index
    %8 = vector.load %arg7[%c0_6, %c0_7] : memref<16x128xf32, #tpu.memory_space<vmem>>, vector<16x128xf32>
    tpu.vector_store %arg7[%c0_6, %c0_7], %7 {strides = array<i32>} : memref<16x128xf32, #tpu.memory_space<vmem>>, vector<16x128xf32>,
    %c0_i32_8 = arith.constant 0 : i32
    %9 = arith.cmpi eq, %arg2, %c0_i32_8 : i32
    %10 = arith.extui %9 : i1 to i32
    %c0_i32_9 = arith.constant 0 : i32
    %11 = arith.cmpi ne, %10, %c0_i32_9 : i32
    scf.if %11 {
      %c0_10 = arith.constant 0 : index
      %c0_11 = arith.constant 0 : index
      %12 = vector.load %arg7[%c0_10, %c0_11] : memref<16x128xf32, #tpu.memory_space<vmem>>, vector<16x128xf32>
      %c0_12 = arith.constant 0 : index
      %c0_13 = arith.constant 0 : index
      %13 = vector.load %arg5[%c0_12, %c0_13] : memref<1x128xf32, #tpu.memory_space<vmem>>, vector<1x128xf32>
      %14 = vector.broadcast %13 : vector<1x128xf32> to vector<16x128xf32>
      %15 = arith.addf %12, %14 : vector<16x128xf32>
      %c0_14 = arith.constant 0 : index
      %c0_15 = arith.constant 0 : index
      %16 = vector.load %arg6[%c0_14, %c0_15] : memref<16x128xf32, #tpu.memory_space<vmem>>, vector<16x128xf32>
      tpu.vector_store %arg6[%c0_14, %c0_15], %15 {strides = array<i32>} : memref<16x128xf32, #tpu.memory_space<vmem>>, vector<16x128xf32>,
    } else {
    }
    return
  }
  func.func @transform_0(%arg0: i32, %arg1: i32, %arg2: i32) -> (i32, i32) {
    %c0_i32 = arith.constant 0 : i32
    return %arg0, %arg2 : i32, i32
  }
  func.func @transform_1(%arg0: i32, %arg1: i32, %arg2: i32) -> (i32, i32) {
    %c0_i32 = arith.constant 0 : i32
    return %arg1, %arg2 : i32, i32
  }
  func.func @transform_2(%arg0: i32, %arg1: i32, %arg2: i32) -> (i32, i32) {
    %c0_i32 = arith.constant 0 : i32
    %c0_i32_0 = arith.constant 0 : i32
    return %c0_i32, %arg1 : i32, i32
  }
  func.func @transform_3(%arg0: i32, %arg1: i32, %arg2: i32) -> (i32, i32) {
    %c0_i32 = arith.constant 0 : i32
    return %arg0, %arg1 : i32, i32
  }
}

</mosaic_0001>

<llo_original>
// kernel: tpu_custom_call.1
$region0: #{tpu_custom_call.1}
  #allocation0 [shape = 'u32[]', space=smem, size = 0x4, offset = 0x4, fixed_abs, tag = 'smem constant byte address 0x4 - core index']
  #allocation1 [shape = 'u32[144,128]{1,0:T(1,128)}', space=vmem, size = 0x12000, scoped, tag = 'internal scratch']
  #allocation2 [shape = 'f32[16,128]{1,0:T(8,128)}', space=vmem, size = 0x2000, scoped, tag = 'scratch operand']
  %s0 = inlined_call_operand.hbm [shape: f32[16,256], index: 0, kind: input, shape index: {}]
  %s1 = inlined_call_operand.hbm [shape: f32[128,256], index: 1, kind: input, shape index: {}]
  %s2 = inlined_call_operand.vmem [shape: f32[1,128], index: 2, kind: input, shape index: {}]
  %s3 = inlined_call_operand.hbm [shape: f32[16,128], index: 3, kind: output, shape index: {}]
  %s4 = sld [smem:[#allocation0]]
  $region38: #{tpu_custom_call.1} parent=0
    _
  %s6 = ssub.s32 1, %s4
  %s7 = scalar_select 0, %s6, %s4
  $region1: #{tpu_custom_call.1} parent=0
    #allocation3 [shape = 'u8[16384]{0}', space=vmem, size = 0x4000, scoped, tag = 'input window, operand 0, single buffered']
    #allocation4 [shape = 's32[1]{0}', space=sflag, size = 0x4, scoped, tag = 'scoped memory for tpu_custom_call.1']
    #allocation5 [shape = 's32[1]{0}', space=sflag, size = 0x4, scoped, tag = 'scoped memory for tpu_custom_call.1']
    #allocation6 [shape = 'u8[131072]{0}', space=vmem, size = 0x20000, scoped, tag = 'input window, operand 1, single buffered']
    #allocation7 [shape = 's32[1]{0}', space=sflag, size = 0x4, scoped, tag = 'scoped memory for tpu_custom_call.1']
    #allocation8 [shape = 'u8[8192]{0}', space=vmem, size = 0x2000, scoped, tag = 'output window, operand 0, single buffered']
    %8 = vsyncpa [#allocation4], 0
    %9 = vsyncpa [#allocation7], 0
    %10 = vsyncpa [#allocation5], 0
    // Predicated region
    $region2: #{tpu_custom_call.1} parent=1 // pred_check
      _
    $region3: #{tpu_custom_call.1} parent=1 // pred_check_branch
      %12 = sbr.rel (0) target = $region5
    $region4: #{tpu_custom_call.1} parent=1 // pred_region
      %s14 = ssub.s32 512, 512
      %15 = vsyncadd [#allocation4], %s14
      %s16 = sshll.u32 [#allocation3], 4
      %s17 = int_to_ptr.vmem [resolvable:$true] %s16
      %22 = dma.hbm_to_vmem [thread:$0]  %s0, 512, %s17, [#allocation4], 256, 256, 16
    $region5: #{tpu_custom_call.1} parent=1 // pred_fallthru
      _
    // Predicated region
    $region6: #{tpu_custom_call.1} parent=1 // pred_check
      _
    $region7: #{tpu_custom_call.1} parent=1 // pred_check_branch
      %24 = sbr.rel (0) target = $region9
    $region8: #{tpu_custom_call.1} parent=1 // pred_region
      %s26 = ssub.s32 4096, 4096
      %27 = vsyncadd [#allocation7], %s26
      %s28 = sshll.u32 [#allocation6], 4
      %s29 = int_to_ptr.vmem [resolvable:$true] %s28
      %34 = dma.hbm_to_vmem [thread:$0]  %s1, 4096, %s29, [#allocation7], 256, 256, 16
    $region9: #{tpu_custom_call.1} parent=1 // pred_fallthru
      _
    // Predicated region
    $region10: #{tpu_custom_call.1} parent=1 // pred_check
      _
    $region11: #{tpu_custom_call.1} parent=1 // pred_check_branch
      %36 = sbr.rel (0) target = $region13
    $region12: #{tpu_custom_call.1} parent=1 // pred_region
      _
    $region13: #{tpu_custom_call.1} parent=1 // pred_fallthru
      _
    // Predicated region
    $region14: #{tpu_custom_call.1} parent=1 // pred_check
      _
    $region15: #{tpu_custom_call.1} parent=1 // pred_check_branch
      %38 = sbr.rel (0) target = $region17
    $region16: #{tpu_custom_call.1} parent=1 // pred_region
      %39 = dma.done [#allocation4], 512
    $region17: #{tpu_custom_call.1} parent=1 // pred_fallthru
      _
    // Predicated region
    $region18: #{tpu_custom_call.1} parent=1 // pred_check
      _
    $region19: #{tpu_custom_call.1} parent=1 // pred_check_branch
      %41 = sbr.rel (0) target = $region21
    $region20: #{tpu_custom_call.1} parent=1 // pred_region
      %42 = dma.done [#allocation7], 4096
    $region21: #{tpu_custom_call.1} parent=1 // pred_fallthru
      _
    %p43 = scmp.eq.s32.totalorder 0, 0
    // Predicated region
    $region22: #{tpu_custom_call.1} parent=1 // pred_check
      %p44 = pneg %p43
    $region23: #{tpu_custom_call.1} parent=1 // pred_check_branch
      %46 = sbr.rel (%p44) target = $region25
    $region24: #{tpu_custom_call.1} parent=1 // pred_region
      %47 = vst [vmem:[#allocation2] sm:$0xff] 0.0
      %48 = vst [vmem:[#allocation2 + $0x8] sm:$0xff] 0.0
    $region25: #{tpu_custom_call.1} parent=1 // pred_fallthru
      _
    %v49 = vld [vmem:[#allocation2] sm:$0xff]
    %v50 = vld [vmem:[#allocation2 + $0x8] sm:$0xff]
    %v51 = vld [vmem:[#allocation3] sm:$0xff]
    %v52 = vld [vmem:[#allocation3 + $0x8] sm:$0xff]
    %v53 = vld [vmem:[#allocation3 + $0x10] sm:$0xff]
    %v54 = vld [vmem:[#allocation3 + $0x18] sm:$0xff]
    %v55 = vld [vmem:[#allocation6] sm:$0xff]
    %v56 = vld [vmem:[#allocation6 + $0x8] sm:$0xff]
    %v57 = vld [vmem:[#allocation6 + $0x10] sm:$0xff]
    %v58 = vld [vmem:[#allocation6 + $0x18] sm:$0xff]
    %v59 = vld [vmem:[#allocation6 + $0x20] sm:$0xff]
    %v60 = vld [vmem:[#allocation6 + $0x28] sm:$0xff]
    %v61 = vld [vmem:[#allocation6 + $0x30] sm:$0xff]
    %v62 = vld [vmem:[#allocation6 + $0x38] sm:$0xff]
    %v63 = vld [vmem:[#allocation6 + $0x40] sm:$0xff]
    %v64 = vld [vmem:[#allocation6 + $0x48] sm:$0xff]
    %v65 = vld [vmem:[#allocation6 + $0x50] sm:$0xff]
    %v66 = vld [vmem:[#allocation6 + $0x58] sm:$0xff]
    %v67 = vld [vmem:[#allocation6 + $0x60] sm:$0xff]
    %v68 = vld [vmem:[#allocation6 + $0x68] sm:$0xff]
    %v69 = vld [vmem:[#allocation6 + $0x70] sm:$0xff]
    %v70 = vld [vmem:[#allocation6 + $0x78] sm:$0xff]
    %v71 = vld [vmem:[#allocation6 + $0x80] sm:$0xff]
    %v72 = vld [vmem:[#allocation6 + $0x88] sm:$0xff]
    %v73 = vld [vmem:[#allocation6 + $0x90] sm:$0xff]
    %v74 = vld [vmem:[#allocation6 + $0x98] sm:$0xff]
    %v75 = vld [vmem:[#allocation6 + $0xa0] sm:$0xff]
    %v76 = vld [vmem:[#allocation6 + $0xa8] sm:$0xff]
    %v77 = vld [vmem:[#allocation6 + $0xb0] sm:$0xff]
    %v78 = vld [vmem:[#allocation6 + $0xb8] sm:$0xff]
    %v79 = vld [vmem:[#allocation6 + $0xc0] sm:$0xff]
    %v80 = vld [vmem:[#allocation6 + $0xc8] sm:$0xff]
    %v81 = vld [vmem:[#allocation6 + $0xd0] sm:$0xff]
    %v82 = vld [vmem:[#allocation6 + $0xd8] sm:$0xff]
    %v83 = vld [vmem:[#allocation6 + $0xe0] sm:$0xff]
    %v84 = vld [vmem:[#allocation6 + $0xe8] sm:$0xff]
    %v85 = vld [vmem:[#allocation6 + $0xf0] sm:$0xff]
    %v86 = vld [vmem:[#allocation6 + $0xf8] sm:$0xff]
    %87 = vmatprep.subr.mxu0 %v56
    %88 = vmatpush1.xpose.msra.mxu0 %v55
    %89 = vmatprep.subr.mxu0 %v58
    %90 = vmatpush1.xpose.msra.mxu0 %v57
    %91 = vmatprep.subr.mxu0 %v60
    %92 = vmatpush1.xpose.msra.mxu0 %v59
    %93 = vmatprep.subr.mxu0 %v62
    %94 = vmatpush1.xpose.msra.mxu0 %v61
    %95 = vmatprep.subr.mxu0 %v64
    %96 = vmatpush1.xpose.msra.mxu0 %v63
    %97 = vmatprep.subr.mxu0 %v66
    %98 = vmatpush1.xpose.msra.mxu0 %v65
    %99 = vmatprep.subr.mxu0 %v68
    %100 = vmatpush1.xpose.msra.mxu0 %v67
    %101 = vmatprep.subr.mxu0 %v70
    %102 = vmatpush1.xpose.msra.mxu0 %v69
    %103 = vmatprep.subr.mxu0 %v72
    %104 = vmatpush1.xpose.msra.mxu0 %v71
    %105 = vmatprep.subr.mxu0 %v74
    %106 = vmatpush1.xpose.msra.mxu0 %v73
    %107 = vmatprep.subr.mxu0 %v76
    %108 = vmatpush1.xpose.msra.mxu0 %v75
    %109 = vmatprep.subr.mxu0 %v78
    %110 = vmatpush1.xpose.msra.mxu0 %v77
    %111 = vmatprep.subr.mxu0 %v80
    %112 = vmatpush1.xpose.msra.mxu0 %v79
    %113 = vmatprep.subr.mxu0 %v82
    %114 = vmatpush1.xpose.msra.mxu0 %v81
    %115 = vmatprep.subr.mxu0 %v84
    %116 = vmatpush1.xpose.msra.mxu0 %v83
    %117 = vmatprep.subr.mxu0 %v86
    %118 = vmatpush1.xpose.msra.mxu0 %v85
    %119 = vmatprep.subr.mxu0 0.0
    %120 = vmatpush1.xpose.msra.mxu0 0.0
    %121 = vmatprep.subr.mxu0 0.0
    %122 = vmatpush1.xpose.msra.mxu0 0.0
    %123 = vmatprep.subr.mxu0 0.0
    %124 = vmatpush1.xpose.msra.mxu0 0.0
    %125 = vmatprep.subr.mxu0 0.0
    %126 = vmatpush1.xpose.msra.mxu0 0.0
    %127 = vmatprep.subr.mxu0 0.0
    %128 = vmatpush1.xpose.msra.mxu0 0.0
    %129 = vmatprep.subr.mxu0 0.0
    %130 = vmatpush1.xpose.msra.mxu0 0.0
    %131 = vmatprep.subr.mxu0 0.0
    %132 = vmatpush1.xpose.msra.mxu0 0.0
    %133 = vmatprep.subr.mxu0 0.0
    %134 = vmatpush1.xpose.msra.mxu0 0.0
    %135 = vmatprep.subr.mxu0 0.0
    %136 = vmatpush1.xpose.msra.mxu0 0.0
    %137 = vmatprep.subr.mxu0 0.0
    %138 = vmatpush1.xpose.msra.mxu0 0.0
    %139 = vmatprep.subr.mxu0 0.0
    %140 = vmatpush1.xpose.msra.mxu0 0.0
    %141 = vmatprep.subr.mxu0 0.0
    %142 = vmatpush1.xpose.msra.mxu0 0.0
    %143 = vmatprep.subr.mxu0 0.0
    %144 = vmatpush1.xpose.msra.mxu0 0.0
    %145 = vmatprep.subr.mxu0 0.0
    %146 = vmatpush1.xpose.msra.mxu0 0.0
    %147 = vmatprep.subr.mxu0 0.0
    %148 = vmatpush1.xpose.msra.mxu0 0.0
    %149 = vmatprep.subr.mxu0 0.0
    %150 = vmatpush1.xpose.msra.mxu0 0.0
    %151 = vmatprep.mubr.f32.mxu0 %v52
    %152 = vmatmul.mubr.f32.gmra.mrb[0].mxu0 %v51
    %v153 = vpop.f32.mrb[0].mxu0
    %v154 = vadd.f32 0.0, %v153
    %v155 = vpop.f32.mrb[0].mxu0
    %156 = vmatprep.mubr.f32.mxu0 %v54
    %157 = vmatmul.mubr.f32.gmra.mrb[0].mxu0 %v53
    %v158 = vpop.f32.mrb[0].mxu0
    %v159 = vadd.f32 0.0, %v158
    %v160 = vpop.f32.mrb[0].mxu0
    %161 = vdwg.mxu0
    %v162 = vadd.f32 %v49, %v154
    %v163 = vadd.f32 %v50, %v159
    %164 = vst [vmem:[#allocation2] sm:$0xff] %v162
    %165 = vst [vmem:[#allocation2 + $0x8] sm:$0xff] %v163
    // Predicated region
    $region26: #{tpu_custom_call.1} parent=1 // pred_check
      %p166 = pneg %p43
    $region27: #{tpu_custom_call.1} parent=1 // pred_check_branch
      %168 = sbr.rel (%p166) target = $region29
    $region28: #{tpu_custom_call.1} parent=1 // pred_region
      %v169 = vld [vmem:[#allocation2] sm:$0xff]
      %v170 = vld [vmem:[#allocation2 + $0x8] sm:$0xff]
      %v171 = vld [vmem:[%s2] sm:$0x1]
      %v173 = vlaneseq
      %v174 = vshrl.u32 %v173, 7
      %v175 = vsub.s32 0, %v174
      %v176 = vrot.slane %v171, %v175
      %v178 = vadd.f32 %v169, %v176
      %v179 = vadd.f32 %v170, %v176
      %180 = vst [vmem:[#allocation8] sm:$0xff] %v178
      %181 = vst [vmem:[#allocation8 + $0x8] sm:$0xff] %v179
    $region29: #{tpu_custom_call.1} parent=1 // pred_fallthru
      _
    // Predicated region
    $region30: #{tpu_custom_call.1} parent=1 // pred_check
      _
    $region31: #{tpu_custom_call.1} parent=1 // pred_check_branch
      %183 = sbr.rel (0) target = $region33
    $region32: #{tpu_custom_call.1} parent=1 // pred_region
      %s185 = ssub.s32 256, 256
      %186 = vsyncadd [#allocation5], %s185
      %s187 = sshll.u32 [#allocation8], 4
      %s188 = int_to_ptr.vmem [resolvable:$true] %s187
      %193 = dma.vmem_to_hbm [thread:$0]  %s188, 256, %s3, [#allocation5], 128, 128, 8
    $region33: #{tpu_custom_call.1} parent=1 // pred_fallthru
      _
    // Predicated region
    $region34: #{tpu_custom_call.1} parent=1 // pred_check
      _
    $region35: #{tpu_custom_call.1} parent=1 // pred_check_branch
      %195 = sbr.rel (0) target = $region37
    $region36: #{tpu_custom_call.1} parent=1 // pred_region
      %196 = dma.done [#allocation5], 256
    $region37: #{tpu_custom_call.1} parent=1 // pred_fallthru
      _
    %197 = vsyncpa [#allocation4], 1
    %198 = vsyncpa [#allocation7], 1
    %199 = vsyncpa [#allocation5], 1

</llo_original>
